<compile_context>
chip_gen: v7x
topology: tpu7x:2x2x1
jax: 0.10.0
libtpu: 0.0.40
codegen_flags: <defaults>
</compile_context>

<pallas_src>
import functools

import jax
import jax.numpy as jnp
from jax.experimental import pallas as pl
from jax.experimental.pallas import tpu as pltpu


def _round_up(x, m):
    return (x + m - 1) // m * m


# ----------------------------------------------------------------------------
# In-kernel 3x3 "same" convolution as one deep matmul
# ----------------------------------------------------------------------------
def _conv3x3(x, w9, not_left, not_right, W, lane_pad):
    """3x3 conv (pad=1, stride=1) on a channels-x-flattened-spatial tile.

    x:         (Cp, H*W)     input, channels on sublanes, H*W on lanes
    w9:        (Cp, 9*Cp)    bf16 weights, [cout, tap*Cp + cin], tap = dy*3+dx
    not_left:  (Cp, H*W)     bool, False where w == 0     (mask for dx == -1)
    not_right: (Cp, H*W)     bool, False where w == W-1   (mask for dx == +1)
    Returns (Cp, H*W) float32.
    """
    Cp, HW = x.shape
    # Zero halo along the lane axis: vertical out-of-bounds taps read zeros.
    zpad = jnp.zeros((Cp, lane_pad), x.dtype)
    xp = jnp.concatenate([zpad, x, zpad], axis=1)          # (Cp, HW + 2*lane_pad)

    taps = []
    for oy in (-1, 0, 1):
        for ox in (-1, 0, 1):
            off = oy * W + ox                              # flattened-spatial shift
            s = xp[:, lane_pad + off: lane_pad + off + HW]  # static lane slice
            if ox == -1:                                   # kill cross-row wrap
                s = jnp.where(not_left, s, 0)
            elif ox == 1:
                s = jnp.where(not_right, s, 0)
            taps.append(s)

    # (9*Cp, HW) im2col slab; sublane-aligned concat (Cp is a multiple of 8).
    im2col = jnp.concatenate(taps, axis=0).astype(jnp.bfloat16)
    # One MXU matmul: K = 9*Cp, N = H*W (lane dense), f32 accumulation.
    return jnp.dot(w9, im2col, preferred_element_type=jnp.float32)


# ----------------------------------------------------------------------------
# Fused BasicBlock kernel (one image per grid step)
# ----------------------------------------------------------------------------
def _basic_block_kernel(x_ref, w1_ref, w2_ref, s1_ref, b1_ref, s2_ref, b2_ref,
                        o_ref, *, H, W):
    Cp, HW = x_ref.shape[1], x_ref.shape[2]
    lane_pad = W + 1                                        # >= max |oy*W + ox|

    x = x_ref[0]                                            # (Cp, HW) f32

    # Row-boundary masks (hoisted; shared by both convs).
    lane = jax.lax.broadcasted_iota(jnp.int32, (Cp, HW), 1)
    col = lane % W
    not_left = col >= 1
    not_right = col <= W - 2

    # conv1 -> bn1 -> relu   (intermediate h never leaves the core)
    h = _conv3x3(x, w1_ref[...], not_left, not_right, W, lane_pad)
    h = jnp.maximum(h * s1_ref[...] + b1_ref[...], 0.0)

    # conv2 -> bn2 -> residual add -> relu
    y = _conv3x3(h, w2_ref[...], not_left, not_right, W, lane_pad)
    y = y * s2_ref[...] + b2_ref[...] + x.astype(jnp.float32)
    o_ref[0] = jnp.maximum(y, 0.0).astype(o_ref.dtype)


# ----------------------------------------------------------------------------
# Wrapper
# ----------------------------------------------------------------------------
def basic_block_forward(x_nchw, params):
    """Pallas BasicBlock.forward (stride=1, inplanes==planes, eval BN)."""
    N, C, H, W = x_nchw.shape
    Cp = _round_up(C, 8)
    HW = H * W

    x = x_nchw.reshape(N, C, HW)                 # free: contiguous NCHW flatten
    if Cp != C:
        x = jnp.pad(x, ((0, 0), (0, Cp - C), (0, 0)))

    kernel = functools.partial(_basic_block_kernel, H=H, W=W)
    out = pl.pallas_call(
        kernel,
        out_shape=jax.ShapeDtypeStruct((N, Cp, HW), x_nchw.dtype),
        grid_spec=pltpu.PrefetchScalarGridSpec(
            num_scalar_prefetch=0,
            grid=(N,),
            in_specs=[
                pl.BlockSpec((1, Cp, HW), lambda n: (n, 0, 0)),     # x
                pl.BlockSpec((Cp, 9 * Cp), lambda n: (0, 0)),       # w1
                pl.BlockSpec((Cp, 9 * Cp), lambda n: (0, 0)),       # w2
                pl.BlockSpec((Cp, 1), lambda n: (0, 0)),            # scale1
                pl.BlockSpec((Cp, 1), lambda n: (0, 0)),            # bias1
                pl.BlockSpec((Cp, 1), lambda n: (0, 0)),            # scale2
                pl.BlockSpec((Cp, 1), lambda n: (0, 0)),            # bias2
            ],
            out_specs=pl.BlockSpec((1, Cp, HW), lambda n: (n, 0, 0)),
        ),
        compiler_params=pltpu.CompilerParams(
            dimension_semantics=("parallel",)),
    )(x, params["w1"], params["w2"],
      params["scale1"], params["bias1"], params["scale2"], params["bias2"])

    return out[:, :C, :].reshape(N, C, H, W)


# ----------------------------------------------------------------------------
# Deterministic parameters + pure-JAX f32 reference
# ----------------------------------------------------------------------------
def make_params(key, inplanes, planes, eps=1e-5):
    assert inplanes == planes, "identity-shortcut BasicBlock only"
    Cp = _round_up(planes, 8)
    ks = jax.random.split(key, 10)

    w1 = jax.random.normal(ks[0], (planes, inplanes, 3, 3), jnp.float32) * 0.1
    w2 = jax.random.normal(ks[1], (planes, planes, 3, 3), jnp.float32) * 0.1
    g1 = 1.0 + 0.1 * jax.random.normal(ks[2], (planes,), jnp.float32)
    b1 = 0.1 * jax.random.normal(ks[3], (planes,), jnp.float32)
    m1 = 0.1 * jax.random.normal(ks[4], (planes,), jnp.float32)
    v1 = jnp.abs(jax.random.normal(ks[5], (planes,), jnp.float32)) + 0.5
    g2 = 1.0 + 0.1 * jax.random.normal(ks[6], (planes,), jnp.float32)
    b2 = 0.1 * jax.random.normal(ks[7], (planes,), jnp.float32)
    m2 = 0.1 * jax.random.normal(ks[8], (planes,), jnp.float32)
    v2 = jnp.abs(jax.random.normal(ks[9], (planes,), jnp.float32)) + 0.5

    def fold(g, b, m, v):
        s = g / jnp.sqrt(v + eps)
        return s, b - m * s

    s1, bias1 = fold(g1, b1, m1, v1)
    s2, bias2 = fold(g2, b2, m2, v2)

    def pack_w(w):  # (Cout, Cin, 3, 3) -> (Cp, 9*Cp) bf16, [cout, tap*Cp + cin]
        cout, cin = w.shape[0], w.shape[1]
        wt = jnp.transpose(w, (2, 3, 1, 0))                        # (3,3,Cin,Cout)
        wt = jnp.pad(wt, ((0, 0), (0, 0), (0, Cp - cin), (0, Cp - cout)))
        wt = wt.reshape(9 * Cp, Cp)
        return jnp.transpose(wt, (1, 0)).astype(jnp.bfloat16)

    def pack_vec(v):  # (C,) -> (Cp, 1) f32 (zero-padded)
        return jnp.pad(v, (0, Cp - v.shape[0]))[:, None].astype(jnp.float32)

    return {
        # packed for the Pallas kernel
        "w1": pack_w(w1), "w2": pack_w(w2),
        "scale1": pack_vec(s1), "bias1": pack_vec(bias1),
        "scale2": pack_vec(s2), "bias2": pack_vec(bias2),
        # raw for the pure-JAX reference
        "w1_nchw": w1, "w2_nchw": w2,
        "scale1_ref": s1, "bias1_ref": bias1,
        "scale2_ref": s2, "bias2_ref": bias2,
    }


def reference_forward(x_nchw, params):
    """Pure-JAX NCHW f32 reference mirroring the PyTorch module (eval BN)."""
    def conv(x, w):
        return jax.lax.conv_general_dilated(
            x, w, window_strides=(1, 1), padding=((1, 1), (1, 1)),
            dimension_numbers=("NCHW", "OIHW", "NCHW"))

    def bn(x, scale, bias):
        return x * scale[None, :, None, None] + bias[None, :, None, None]

    out = jnp.maximum(bn(conv(x_nchw, params["w1_nchw"]),
                         params["scale1_ref"], params["bias1_ref"]), 0.0)
    out = bn(conv(out, params["w2_nchw"]),
             params["scale2_ref"], params["bias2_ref"])
    out = out + x_nchw
    return jnp.maximum(out, 0.0)


if __name__ == "__main__":
    key = jax.random.PRNGKey(0)
    k_x, k_p = jax.random.split(key)

    N, C, H, W = 2, 4, 16, 16            # inplanes == planes == 4, stride == 1
    x = jax.random.normal(k_x, (N, C, H, W), jnp.float32)
    params = make_params(k_p, C, C)

    y = jax.block_until_ready(basic_block_forward(x, params))
    y_ref = jax.block_until_ready(reference_forward(x, params))

    assert y.shape == (N, C, H, W)
    # Kernel uses bf16 MXU operands with f32 accumulation -> compare at
    # bf16-level tolerance against the pure-f32 reference.
    err = float(jnp.max(jnp.abs(y - y_ref)))
    assert jnp.allclose(y, y_ref, atol=3e-2, rtol=3e-2), f"max abs err {err}"
    print("KERNEL_OK")
</pallas_src>

<mosaic_0001>
module attributes {stable_mosaic.version = 11 : i64} {
  func.func @_basic_block_kernel(%arg0: i32, %arg1: memref<1x8x256xf32, #tpu.memory_space<vmem>>, %arg2: memref<8x72xbf16, #tpu.memory_space<vmem>>, %arg3: memref<8x72xbf16, #tpu.memory_space<vmem>>, %arg4: memref<8x1xf32, #tpu.memory_space<vmem>>, %arg5: memref<8x1xf32, #tpu.memory_space<vmem>>, %arg6: memref<8x1xf32, #tpu.memory_space<vmem>>, %arg7: memref<8x1xf32, #tpu.memory_space<vmem>>, %arg8: memref<1x8x256xf32, #tpu.memory_space<vmem>>) attributes {dimension_semantics = [#tpu.dimension_semantics<parallel>], iteration_bounds = array<i64: 2>, scalar_prefetch = 0 : i64, scratch_operands = 0 : i64, tpu.core_type = #tpu.core_type<tc>, window_params = [{transform_indices = @transform_0, window_bounds = array<i64: 1, 8, 256>}, {pipeline_mode = #tpu.pipeline_mode<synchronous>, transform_indices = @transform_1, window_bounds = array<i64: 8, 72>}, {pipeline_mode = #tpu.pipeline_mode<synchronous>, transform_indices = @transform_2, window_bounds = array<i64: 8, 72>}, {pipeline_mode = #tpu.pipeline_mode<synchronous>, transform_indices = @transform_3, window_bounds = array<i64: 8, 1>}, {pipeline_mode = #tpu.pipeline_mode<synchronous>, transform_indices = @transform_4, window_bounds = array<i64: 8, 1>}, {pipeline_mode = #tpu.pipeline_mode<synchronous>, transform_indices = @transform_5, window_bounds = array<i64: 8, 1>}, {pipeline_mode = #tpu.pipeline_mode<synchronous>, transform_indices = @transform_6, window_bounds = array<i64: 8, 1>}, {transform_indices = @transform_7, window_bounds = array<i64: 1, 8, 256>}]} {
    %c0 = arith.constant 0 : index
    %c0_0 = arith.constant 0 : index
    %c0_1 = arith.constant 0 : index
    %0 = vector.load %arg1[%c0, %c0_0, %c0_1] : memref<1x8x256xf32, #tpu.memory_space<vmem>>, vector<1x8x256xf32>
    %1 = vector.shape_cast %0 : vector<1x8x256xf32> to vector<8x256xf32>
    %2 = tpu.iota {dimensions = array<i32: 1>} : vector<8x256xi32>
    %c16_i32 = arith.constant 16 : i32
    %c0_i32 = arith.constant 0 : i32
    %3 = arith.cmpi eq, %c16_i32, %c0_i32 : i32
    %c1_i32 = arith.constant 1 : i32
    %4 = arith.select %3, %c1_i32, %c16_i32 : i32
    %5 = vector.broadcast %4 : i32 to vector<8x256xi32>
    %6 = arith.remsi %2, %5 : vector<8x256xi32>
    %c0_i32_2 = arith.constant 0 : i32
    %7 = vector.broadcast %c0_i32_2 : i32 to vector<8x256xi32>
    %8 = arith.cmpi ne, %6, %7 : vector<8x256xi32>
    %c0_i32_3 = arith.constant 0 : i32
    %9 = vector.broadcast %c0_i32_3 : i32 to vector<8x256xi32>
    %10 = arith.cmpi slt, %6, %9 : vector<8x256xi32>
    %c0_i32_4 = arith.constant 0 : i32
    %11 = arith.cmpi slt, %4, %c0_i32_4 : i32
    %12 = vector.broadcast %11 : i1 to vector<8x256xi1>
    %13 = vector.broadcast %12 : vector<8x256xi1> to vector<8x256xi1>
    %14 = arith.xori %10, %13 : vector<8x256xi1>
    %15 = arith.andi %14, %8 : vector<8x256xi1>
    %16 = vector.broadcast %4 : i32 to vector<8x256xi32>
    %17 = arith.addi %6, %16 : vector<8x256xi32>
    %18 = arith.select %15, %17, %6 : vector<8x256xi1>, vector<8x256xi32>
    %c1_i32_5 = arith.constant 1 : i32
    %19 = vector.broadcast %c1_i32_5 : i32 to vector<8x256xi32>
    %20 = arith.cmpi sge, %18, %19 : vector<8x256xi32>
    %c14_i32 = arith.constant 14 : i32
    %21 = vector.broadcast %c14_i32 : i32 to vector<8x256xi32>
    %22 = arith.cmpi sle, %18, %21 : vector<8x256xi32>
    %c0_6 = arith.constant 0 : index
    %c0_7 = arith.constant 0 : index
    %23 = vector.load %arg2[%c0_6, %c0_7] : memref<8x72xbf16, #tpu.memory_space<vmem>>, vector<8x72xbf16>
    %cst = arith.constant 0.000000e+00 : f32
    %24 = vector.broadcast %cst : f32 to vector<8x17xf32>
    %25 = tpu.concatenate %24, %1, %24 in 1 : vector<8x17xf32>, vector<8x256xf32>, vector<8x17xf32> -> vector<8x290xf32>
    %26 = vector.extract_strided_slice %25 {offsets = [0, 0], sizes = [8, 256], strides = [1, 1]} : vector<8x290xf32> to vector<8x256xf32>
    %c0_i32_8 = arith.constant 0 : i32
    %27 = arith.sitofp %c0_i32_8 : i32 to f32
    %28 = vector.broadcast %27 : f32 to vector<8x256xf32>
    %29 = arith.select %20, %26, %28 : vector<8x256xi1>, vector<8x256xf32>
    %30 = vector.extract_strided_slice %25 {offsets = [0, 1], sizes = [8, 256], strides = [1, 1]} : vector<8x290xf32> to vector<8x256xf32>
    %31 = vector.extract_strided_slice %25 {offsets = [0, 2], sizes = [8, 256], strides = [1, 1]} : vector<8x290xf32> to vector<8x256xf32>
    %c0_i32_9 = arith.constant 0 : i32
    %32 = arith.sitofp %c0_i32_9 : i32 to f32
    %33 = vector.broadcast %32 : f32 to vector<8x256xf32>
    %34 = arith.select %22, %31, %33 : vector<8x256xi1>, vector<8x256xf32>
    %35 = vector.extract_strided_slice %25 {offsets = [0, 16], sizes = [8, 256], strides = [1, 1]} : vector<8x290xf32> to vector<8x256xf32>
    %c0_i32_10 = arith.constant 0 : i32
    %36 = arith.sitofp %c0_i32_10 : i32 to f32
    %37 = vector.broadcast %36 : f32 to vector<8x256xf32>
    %38 = arith.select %20, %35, %37 : vector<8x256xi1>, vector<8x256xf32>
    %39 = vector.extract_strided_slice %25 {offsets = [0, 17], sizes = [8, 256], strides = [1, 1]} : vector<8x290xf32> to vector<8x256xf32>
    %40 = vector.extract_strided_slice %25 {offsets = [0, 18], sizes = [8, 256], strides = [1, 1]} : vector<8x290xf32> to vector<8x256xf32>
    %c0_i32_11 = arith.constant 0 : i32
    %41 = arith.sitofp %c0_i32_11 : i32 to f32
    %42 = vector.broadcast %41 : f32 to vector<8x256xf32>
    %43 = arith.select %22, %40, %42 : vector<8x256xi1>, vector<8x256xf32>
    %44 = vector.extract_strided_slice %25 {offsets = [0, 32], sizes = [8, 256], strides = [1, 1]} : vector<8x290xf32> to vector<8x256xf32>
    %c0_i32_12 = arith.constant 0 : i32
    %45 = arith.sitofp %c0_i32_12 : i32 to f32
    %46 = vector.broadcast %45 : f32 to vector<8x256xf32>
    %47 = arith.select %20, %44, %46 : vector<8x256xi1>, vector<8x256xf32>
    %48 = vector.extract_strided_slice %25 {offsets = [0, 33], sizes = [8, 256], strides = [1, 1]} : vector<8x290xf32> to vector<8x256xf32>
    %49 = vector.extract_strided_slice %25 {offsets = [0, 34], sizes = [8, 256], strides = [1, 1]} : vector<8x290xf32> to vector<8x256xf32>
    %c0_i32_13 = arith.constant 0 : i32
    %50 = arith.sitofp %c0_i32_13 : i32 to f32
    %51 = vector.broadcast %50 : f32 to vector<8x256xf32>
    %52 = arith.select %22, %49, %51 : vector<8x256xi1>, vector<8x256xf32>
    %53 = tpu.concatenate %29, %30, %34, %38, %39, %43, %47, %48, %52 in 0 : vector<8x256xf32>, vector<8x256xf32>, vector<8x256xf32>, vector<8x256xf32>, vector<8x256xf32>, vector<8x256xf32>, vector<8x256xf32>, vector<8x256xf32>, vector<8x256xf32> -> vector<72x256xf32>
    %54 = arith.truncf %53 : vector<72x256xf32> to vector<72x256xbf16>
    %cst_14 = arith.constant dense<0.000000e+00> : vector<8x256xf32>
    %55 = tpu.matmul %23, %54, %cst_14 {dimension_numbers = #tpu.dot_dimension_numbers<[1], [0], [0], [1], [0, 0, 1, 1], [], []>} : vector<8x72xbf16>, vector<72x256xbf16>, vector<8x256xf32> -> vector<8x256xf32>
    %c0_15 = arith.constant 0 : index
    %c0_16 = arith.constant 0 : index
    %56 = vector.load %arg4[%c0_15, %c0_16] : memref<8x1xf32, #tpu.memory_space<vmem>>, vector<8x1xf32>
    %57 = vector.broadcast %56 : vector<8x1xf32> to vector<8x256xf32>
    %58 = arith.mulf %55, %57 : vector<8x256xf32>
    %c0_17 = arith.constant 0 : index
    %c0_18 = arith.constant 0 : index
    %59 = vector.load %arg5[%c0_17, %c0_18] : memref<8x1xf32, #tpu.memory_space<vmem>>, vector<8x1xf32>
    %60 = vector.broadcast %59 : vector<8x1xf32> to vector<8x256xf32>
    %61 = arith.addf %58, %60 : vector<8x256xf32>
    %cst_19 = arith.constant 0.000000e+00 : f32
    %62 = vector.broadcast %cst_19 : f32 to vector<8x256xf32>
    %63 = arith.maximumf %61, %62 : vector<8x256xf32>
    %c0_20 = arith.constant 0 : index
    %c0_21 = arith.constant 0 : index
    %64 = vector.load %arg3[%c0_20, %c0_21] : memref<8x72xbf16, #tpu.memory_space<vmem>>, vector<8x72xbf16>
    %cst_22 = arith.constant 0.000000e+00 : f32
    %65 = vector.broadcast %cst_22 : f32 to vector<8x17xf32>
    %66 = tpu.concatenate %65, %63, %65 in 1 : vector<8x17xf32>, vector<8x256xf32>, vector<8x17xf32> -> vector<8x290xf32>
    %67 = vector.extract_strided_slice %66 {offsets = [0, 0], sizes = [8, 256], strides = [1, 1]} : vector<8x290xf32> to vector<8x256xf32>
    %c0_i32_23 = arith.constant 0 : i32
    %68 = arith.sitofp %c0_i32_23 : i32 to f32
    %69 = vector.broadcast %68 : f32 to vector<8x256xf32>
    %70 = arith.select %20, %67, %69 : vector<8x256xi1>, vector<8x256xf32>
    %71 = vector.extract_strided_slice %66 {offsets = [0, 1], sizes = [8, 256], strides = [1, 1]} : vector<8x290xf32> to vector<8x256xf32>
    %72 = vector.extract_strided_slice %66 {offsets = [0, 2], sizes = [8, 256], strides = [1, 1]} : vector<8x290xf32> to vector<8x256xf32>
    %c0_i32_24 = arith.constant 0 : i32
    %73 = arith.sitofp %c0_i32_24 : i32 to f32
    %74 = vector.broadcast %73 : f32 to vector<8x256xf32>
    %75 = arith.select %22, %72, %74 : vector<8x256xi1>, vector<8x256xf32>
    %76 = vector.extract_strided_slice %66 {offsets = [0, 16], sizes = [8, 256], strides = [1, 1]} : vector<8x290xf32> to vector<8x256xf32>
    %c0_i32_25 = arith.constant 0 : i32
    %77 = arith.sitofp %c0_i32_25 : i32 to f32
    %78 = vector.broadcast %77 : f32 to vector<8x256xf32>
    %79 = arith.select %20, %76, %78 : vector<8x256xi1>, vector<8x256xf32>
    %80 = vector.extract_strided_slice %66 {offsets = [0, 17], sizes = [8, 256], strides = [1, 1]} : vector<8x290xf32> to vector<8x256xf32>
    %81 = vector.extract_strided_slice %66 {offsets = [0, 18], sizes = [8, 256], strides = [1, 1]} : vector<8x290xf32> to vector<8x256xf32>
    %c0_i32_26 = arith.constant 0 : i32
    %82 = arith.sitofp %c0_i32_26 : i32 to f32
    %83 = vector.broadcast %82 : f32 to vector<8x256xf32>
    %84 = arith.select %22, %81, %83 : vector<8x256xi1>, vector<8x256xf32>
    %85 = vector.extract_strided_slice %66 {offsets = [0, 32], sizes = [8, 256], strides = [1, 1]} : vector<8x290xf32> to vector<8x256xf32>
    %c0_i32_27 = arith.constant 0 : i32
    %86 = arith.sitofp %c0_i32_27 : i32 to f32
    %87 = vector.broadcast %86 : f32 to vector<8x256xf32>
    %88 = arith.select %20, %85, %87 : vector<8x256xi1>, vector<8x256xf32>
    %89 = vector.extract_strided_slice %66 {offsets = [0, 33], sizes = [8, 256], strides = [1, 1]} : vector<8x290xf32> to vector<8x256xf32>
    %90 = vector.extract_strided_slice %66 {offsets = [0, 34], sizes = [8, 256], strides = [1, 1]} : vector<8x290xf32> to vector<8x256xf32>
    %c0_i32_28 = arith.constant 0 : i32
    %91 = arith.sitofp %c0_i32_28 : i32 to f32
    %92 = vector.broadcast %91 : f32 to vector<8x256xf32>
    %93 = arith.select %22, %90, %92 : vector<8x256xi1>, vector<8x256xf32>
    %94 = tpu.concatenate %70, %71, %75, %79, %80, %84, %88, %89, %93 in 0 : vector<8x256xf32>, vector<8x256xf32>, vector<8x256xf32>, vector<8x256xf32>, vector<8x256xf32>, vector<8x256xf32>, vector<8x256xf32>, vector<8x256xf32>, vector<8x256xf32> -> vector<72x256xf32>
    %95 = arith.truncf %94 : vector<72x256xf32> to vector<72x256xbf16>
    %cst_29 = arith.constant dense<0.000000e+00> : vector<8x256xf32>
    %96 = tpu.matmul %64, %95, %cst_29 {dimension_numbers = #tpu.dot_dimension_numbers<[1], [0], [0], [1], [0, 0, 1, 1], [], []>} : vector<8x72xbf16>, vector<72x256xbf16>, vector<8x256xf32> -> vector<8x256xf32>
    %c0_30 = arith.constant 0 : index
    %c0_31 = arith.constant 0 : index
    %97 = vector.load %arg6[%c0_30, %c0_31] : memref<8x1xf32, #tpu.memory_space<vmem>>, vector<8x1xf32>
    %98 = vector.broadcast %97 : vector<8x1xf32> to vector<8x256xf32>
    %99 = arith.mulf %96, %98 : vector<8x256xf32>
    %c0_32 = arith.constant 0 : index
    %c0_33 = arith.constant 0 : index
    %100 = vector.load %arg7[%c0_32, %c0_33] : memref<8x1xf32, #tpu.memory_space<vmem>>, vector<8x1xf32>
    %101 = vector.broadcast %100 : vector<8x1xf32> to vector<8x256xf32>
    %102 = arith.addf %99, %101 : vector<8x256xf32>
    %103 = arith.addf %102, %1 : vector<8x256xf32>
    %cst_34 = arith.constant 0.000000e+00 : f32
    %104 = vector.broadcast %cst_34 : f32 to vector<8x256xf32>
    %105 = arith.maximumf %103, %104 : vector<8x256xf32>
    %c0_35 = arith.constant 0 : index
    %c0_36 = arith.constant 0 : index
    %c0_37 = arith.constant 0 : index
    %106 = vector.load %arg8[%c0_35, %c0_36, %c0_37] : memref<1x8x256xf32, #tpu.memory_space<vmem>>, vector<1x8x256xf32>
    %107 = vector.shape_cast %106 : vector<1x8x256xf32> to vector<8x256xf32>
    %108 = vector.shape_cast %105 : vector<8x256xf32> to vector<1x8x256xf32>
    tpu.vector_store %arg8[%c0_35, %c0_36, %c0_37], %108 {strides = array<i32>} : memref<1x8x256xf32, #tpu.memory_space<vmem>>, vector<1x8x256xf32>,
    return
  }
  func.func @transform_0(%arg0: i32) -> (i32, i32, i32) {
    %c0_i32 = arith.constant 0 : i32
    %c0_i32_0 = arith.constant 0 : i32
    %c0_i32_1 = arith.constant 0 : i32
    return %arg0, %c0_i32, %c0_i32_0 : i32, i32, i32
  }
  func.func @transform_1(%arg0: i32) -> (i32, i32) {
    %c0_i32 = arith.constant 0 : i32
    %c0_i32_0 = arith.constant 0 : i32
    %c0_i32_1 = arith.constant 0 : i32
    return %c0_i32, %c0_i32_0 : i32, i32
  }
  func.func @transform_2(%arg0: i32) -> (i32, i32) {
    %c0_i32 = arith.constant 0 : i32
    %c0_i32_0 = arith.constant 0 : i32
    %c0_i32_1 = arith.constant 0 : i32
    return %c0_i32, %c0_i32_0 : i32, i32
  }
  func.func @transform_3(%arg0: i32) -> (i32, i32) {
    %c0_i32 = arith.constant 0 : i32
    %c0_i32_0 = arith.constant 0 : i32
    %c0_i32_1 = arith.constant 0 : i32
    return %c0_i32, %c0_i32_0 : i32, i32
  }
  func.func @transform_4(%arg0: i32) -> (i32, i32) {
    %c0_i32 = arith.constant 0 : i32
    %c0_i32_0 = arith.constant 0 : i32
    %c0_i32_1 = arith.constant 0 : i32
    return %c0_i32, %c0_i32_0 : i32, i32
  }
  func.func @transform_5(%arg0: i32) -> (i32, i32) {
    %c0_i32 = arith.constant 0 : i32
    %c0_i32_0 = arith.constant 0 : i32
    %c0_i32_1 = arith.constant 0 : i32
    return %c0_i32, %c0_i32_0 : i32, i32
  }
  func.func @transform_6(%arg0: i32) -> (i32, i32) {
    %c0_i32 = arith.constant 0 : i32
    %c0_i32_0 = arith.constant 0 : i32
    %c0_i32_1 = arith.constant 0 : i32
    return %c0_i32, %c0_i32_0 : i32, i32
  }
  func.func @transform_7(%arg0: i32) -> (i32, i32, i32) {
    %c0_i32 = arith.constant 0 : i32
    %c0_i32_0 = arith.constant 0 : i32
    %c0_i32_1 = arith.constant 0 : i32
    return %arg0, %c0_i32, %c0_i32_0 : i32, i32, i32
  }
}

</mosaic_0001>

<llo_original>
// kernel: tpu_custom_call.1
$region0: #{tpu_custom_call.1}
  #allocation0 [shape = 'u32[]', space=smem, size = 0x4, offset = 0x4, fixed_abs, tag = 'smem constant byte address 0x4 - core index']
  #allocation1 [shape = 'u32[144,128]{1,0:T(1,128)}', space=vmem, size = 0x12000, scoped, tag = 'internal scratch']
  %s0 = inlined_call_operand.vmem [shape: f32[2,8,256], index: 0, kind: input, shape index: {}]
  %s1 = inlined_call_operand.vmem [shape: bf16[8,72], index: 1, kind: input, shape index: {}]
  %s2 = inlined_call_operand.vmem [shape: bf16[8,72], index: 2, kind: input, shape index: {}]
  %s3 = inlined_call_operand.vmem [shape: f32[8,1], index: 3, kind: input, shape index: {}]
  %s4 = inlined_call_operand.vmem [shape: f32[8,1], index: 4, kind: input, shape index: {}]
  %s5 = inlined_call_operand.vmem [shape: f32[8,1], index: 5, kind: input, shape index: {}]
  %s6 = inlined_call_operand.vmem [shape: f32[8,1], index: 6, kind: input, shape index: {}]
  %s7 = inlined_call_operand.hbm [shape: f32[2,8,256], index: 7, kind: output, shape index: {}]
  %s8 = sld [smem:[#allocation0]]
  $region61: #{tpu_custom_call.1} parent=0
    _
  %s10 = ssub.s32 1, %s8
  %s11 = scalar_select 0, %s10, %s8
  $region1: #{tpu_custom_call.1} parent=0
    #allocation2 [shape = 'u8[16384]{0}', space=vmem, size = 0x4000, scoped, tag = 'output window, operand 0']
    #allocation3 [shape = 's32[2]{0}', space=sflag, size = 0x8, scoped, tag = 'scoped memory for tpu_custom_call.1']
    %12 = vsyncpa [#allocation3], 0
    %s13 = scalar_lea.sflag [#allocation3], 1
    %14 = vsyncpa %s13, 0
    loop: start=0, step=1, limit=4
    $region2: #{tpu_custom_call.1} parent=1 // loop_pre_header
      _
    $region3: #{tpu_custom_call.1} parent=1 // loop_header
      %s16 = sphi 0, %s20
      %p17 = scmp.ge.s32.totalorder %s16, 4
      %s26 = sphi 0, %s28
      %s29 = sphi 0, %s26
      %s30 = sphi 0, %s29
      %s46 = sphi 0, %s30
      %s50 = sphi 0, %s50
      %s52 = sphi 0, %s50
      %s53 = sphi 0, %s52
      %s67 = sphi 0, %s53
      %s71 = sphi 0, %s71
      %s73 = sphi 0, %s71
      %s74 = sphi 0, %s73
      %s88 = sphi 0, %s74
      %s92 = sphi 0, %s92
      %s94 = sphi 0, %s92
      %s95 = sphi 0, %s94
      %s109 = sphi 0, %s95
      %s113 = sphi 0, %s113
      %s115 = sphi 0, %s113
      %s116 = sphi 0, %s115
      %s130 = sphi 0, %s116
      %s134 = sphi 0, %s134
      %s136 = sphi 0, %s134
      %s137 = sphi 0, %s136
      %s151 = sphi 0, %s137
      %s155 = sphi 0, %s155
      %s157 = sphi 0, %s155
      %s158 = sphi 0, %s157
      %s172 = sphi 0, %s158
      %s178 = sphi 0, %s180
      %s181 = sphi 0, %s178
      %s182 = sphi 0, %s181
      %s198 = sphi 0, %s182
    $region4: #{tpu_custom_call.1} parent=1 // loop_header_branch
      %19 = sbr.rel (%p17) target = $region8
    $region5: #{tpu_custom_call.1} parent=1 // loop_body
      %s21 = ssub.s32 %s16, 1
      %s22 = ssub.s32 %s16, 2
      %s23 = sadd.s32 %s16, 1
      %s24 = ssub.s32 %s16, %s23
      %p25 = scmp.eq.s32.totalorder %s24, 0
      %s27 = sadd.s32 %s26, 1
      %s28 = scalar_select %p25, %s26, %s27
      %p31 = pneg %p25
      %p32 = scmp.eq.s32.totalorder %s16, 1
      %p33 = por %p31, %p32
      %p34 = scmp.ne.s32.totalorder %s26, %s29
      %p35 = scmp.eq.s32.totalorder %s16, 0
      %p36 = por %p34, %p35
      %p37 = scmp.ne.s32.totalorder %s26, %s29
      %p38 = scmp.eq.s32.totalorder %s21, 1
      %p39 = por %p37, %p38
      %p40 = scmp.ne.s32.totalorder %s29, %s30
      %p41 = scmp.eq.s32.totalorder %s21, 0
      %p42 = por %p40, %p41
      %p43 = scmp.ne.s32.totalorder %s29, %s30
      %p44 = scmp.eq.s32.totalorder %s22, 1
      %p45 = por %p43, %p44
      %p47 = scmp.ne.s32.totalorder %s30, %s46
      %p48 = scmp.eq.s32.totalorder %s22, 0
      %p49 = por %p47, %p48
      %s51 = sadd.s32 %s50, 1
      %p54 = scmp.eq.s32.totalorder %s16, 1
      %p55 = scmp.ne.s32.totalorder %s50, %s52
      %p56 = scmp.eq.s32.totalorder %s16, 0
      %p57 = por %p55, %p56
      %p58 = scmp.ne.s32.totalorder %s50, %s52
      %p59 = scmp.eq.s32.totalorder %s21, 1
      %p60 = por %p58, %p59
      %p61 = scmp.ne.s32.totalorder %s52, %s53
      %p62 = scmp.eq.s32.totalorder %s21, 0
      %p63 = por %p61, %p62
      %p64 = scmp.ne.s32.totalorder %s52, %s53
      %p65 = scmp.eq.s32.totalorder %s22, 1
      %p66 = por %p64, %p65
      %p68 = scmp.ne.s32.totalorder %s53, %s67
      %p69 = scmp.eq.s32.totalorder %s22, 0
      %p70 = por %p68, %p69
      %s72 = sadd.s32 %s71, 1
      %p75 = scmp.eq.s32.totalorder %s16, 1
      %p76 = scmp.ne.s32.totalorder %s71, %s73
      %p77 = scmp.eq.s32.totalorder %s16, 0
      %p78 = por %p76, %p77
      %p79 = scmp.ne.s32.totalorder %s71, %s73
      %p80 = scmp.eq.s32.totalorder %s21, 1
      %p81 = por %p79, %p80
      %p82 = scmp.ne.s32.totalorder %s73, %s74
      %p83 = scmp.eq.s32.totalorder %s21, 0
      %p84 = por %p82, %p83
      %p85 = scmp.ne.s32.totalorder %s73, %s74
      %p86 = scmp.eq.s32.totalorder %s22, 1
      %p87 = por %p85, %p86
      %p89 = scmp.ne.s32.totalorder %s74, %s88
      %p90 = scmp.eq.s32.totalorder %s22, 0
      %p91 = por %p89, %p90
      %s93 = sadd.s32 %s92, 1
      %p96 = scmp.eq.s32.totalorder %s16, 1
      %p97 = scmp.ne.s32.totalorder %s92, %s94
      %p98 = scmp.eq.s32.totalorder %s16, 0
      %p99 = por %p97, %p98
      %p100 = scmp.ne.s32.totalorder %s92, %s94
      %p101 = scmp.eq.s32.totalorder %s21, 1
      %p102 = por %p100, %p101
      %p103 = scmp.ne.s32.totalorder %s94, %s95
      %p104 = scmp.eq.s32.totalorder %s21, 0
      %p105 = por %p103, %p104
      %p106 = scmp.ne.s32.totalorder %s94, %s95
      %p107 = scmp.eq.s32.totalorder %s22, 1
      %p108 = por %p106, %p107
      %p110 = scmp.ne.s32.totalorder %s95, %s109
      %p111 = scmp.eq.s32.totalorder %s22, 0
      %p112 = por %p110, %p111
      %s114 = sadd.s32 %s113, 1
      %p117 = scmp.eq.s32.totalorder %s16, 1
      %p118 = scmp.ne.s32.totalorder %s113, %s115
      %p119 = scmp.eq.s32.totalorder %s16, 0
      %p120 = por %p118, %p119
      %p121 = scmp.ne.s32.totalorder %s113, %s115
      %p122 = scmp.eq.s32.totalorder %s21, 1
      %p123 = por %p121, %p122
      %p124 = scmp.ne.s32.totalorder %s115, %s116
      %p125 = scmp.eq.s32.totalorder %s21, 0
      %p126 = por %p124, %p125
      %p127 = scmp.ne.s32.totalorder %s115, %s116
      %p128 = scmp.eq.s32.totalorder %s22, 1
      %p129 = por %p127, %p128
      %p131 = scmp.ne.s32.totalorder %s116, %s130
      %p132 = scmp.eq.s32.totalorder %s22, 0
      %p133 = por %p131, %p132
      %s135 = sadd.s32 %s134, 1
      %p138 = scmp.eq.s32.totalorder %s16, 1
      %p139 = scmp.ne.s32.totalorder %s134, %s136
      %p140 = scmp.eq.s32.totalorder %s16, 0
      %p141 = por %p139, %p140
      %p142 = scmp.ne.s32.totalorder %s134, %s136
      %p143 = scmp.eq.s32.totalorder %s21, 1
      %p144 = por %p142, %p143
      %p145 = scmp.ne.s32.totalorder %s136, %s137
      %p146 = scmp.eq.s32.totalorder %s21, 0
      %p147 = por %p145, %p146
      %p148 = scmp.ne.s32.totalorder %s136, %s137
      %p149 = scmp.eq.s32.totalorder %s22, 1
      %p150 = por %p148, %p149
      %p152 = scmp.ne.s32.totalorder %s137, %s151
      %p153 = scmp.eq.s32.totalorder %s22, 0
      %p154 = por %p152, %p153
      %s156 = sadd.s32 %s155, 1
      %p159 = scmp.eq.s32.totalorder %s16, 1
      %p160 = scmp.ne.s32.totalorder %s155, %s157
      %p161 = scmp.eq.s32.totalorder %s16, 0
      %p162 = por %p160, %p161
      %p163 = scmp.ne.s32.totalorder %s155, %s157
      %p164 = scmp.eq.s32.totalorder %s21, 1
      %p165 = por %p163, %p164
      %p166 = scmp.ne.s32.totalorder %s157, %s158
      %p167 = scmp.eq.s32.totalorder %s21, 0
      %p168 = por %p166, %p167
      %p169 = scmp.ne.s32.totalorder %s157, %s158
      %p170 = scmp.eq.s32.totalorder %s22, 1
      %p171 = por %p169, %p170
      %p173 = scmp.ne.s32.totalorder %s158, %s172
      %p174 = scmp.eq.s32.totalorder %s22, 0
      %p175 = por %p173, %p174
      %s176 = ssub.s32 %s16, %s23
      %p177 = scmp.eq.s32.totalorder %s176, 0
      %s179 = sadd.s32 %s178, 1
      %s180 = scalar_select %p177, %s178, %s179
      %p183 = pneg %p177
      %p184 = scmp.eq.s32.totalorder %s16, 1
      %p185 = por %p183, %p184
      %p186 = scmp.ne.s32.totalorder %s178, %s181
      %p187 = scmp.eq.s32.totalorder %s16, 0
      %p188 = por %p186, %p187
      %p189 = scmp.ne.s32.totalorder %s178, %s181
      %p190 = scmp.eq.s32.totalorder %s21, 1
      %p191 = por %p189, %p190
      %p192 = scmp.ne.s32.totalorder %s181, %s182
      %p193 = scmp.eq.s32.totalorder %s21, 0
      %p194 = por %p192, %p193
      %p195 = scmp.ne.s32.totalorder %s181, %s182
      %p196 = scmp.eq.s32.totalorder %s22, 1
      %p197 = por %p195, %p196
      %p199 = scmp.ne.s32.totalorder %s182, %s198
      %p200 = scmp.eq.s32.totalorder %s22, 0
      %p201 = por %p199, %p200
      %p202 = scmp.le.s32.totalorder 1, %s16
      %p203 = scmp.lt.s32.totalorder %s16, 3
      %p204 = pnand %p202, %p203
      %p205 = pneg %p204
      // Predicated region
      $region9: #{tpu_custom_call.1} parent=5 // pred_check
        _
      $region10: #{tpu_custom_call.1} parent=5 // pred_check_branch
        %207 = sbr.rel (%p204) target = $region12
      $region11: #{tpu_custom_call.1} parent=5 // pred_region
        %s208 = ssub.s32 %s16, 1
        // Predicated region
        $region13: #{tpu_custom_call.1} parent=11 // pred_check
          %p209 = pneg %p63
        $region14: #{tpu_custom_call.1} parent=11 // pred_check_branch
          %211 = sbr.rel (%p209) target = $region16
        $region15: #{tpu_custom_call.1} parent=11 // pred_region
          _
        $region16: #{tpu_custom_call.1} parent=11 // pred_fallthru
          _
        // Predicated region
        $region17: #{tpu_custom_call.1} parent=11 // pred_check
          %p212 = pneg %p84
        $region18: #{tpu_custom_call.1} parent=11 // pred_check_branch
          %214 = sbr.rel (%p212) target = $region20
        $region19: #{tpu_custom_call.1} parent=11 // pred_region
          _
        $region20: #{tpu_custom_call.1} parent=11 // pred_fallthru
          _
        // Predicated region
        $region21: #{tpu_custom_call.1} parent=11 // pred_check
          %p215 = pneg %p105
        $region22: #{tpu_custom_call.1} parent=11 // pred_check_branch
          %217 = sbr.rel (%p215) target = $region24
        $region23: #{tpu_custom_call.1} parent=11 // pred_region
          _
        $region24: #{tpu_custom_call.1} parent=11 // pred_fallthru
          _
        // Predicated region
        $region25: #{tpu_custom_call.1} parent=11 // pred_check
          %p218 = pneg %p126
        $region26: #{tpu_custom_call.1} parent=11 // pred_check_branch
          %220 = sbr.rel (%p218) target = $region28
        $region27: #{tpu_custom_call.1} parent=11 // pred_region
          _
        $region28: #{tpu_custom_call.1} parent=11 // pred_fallthru
          _
        // Predicated region
        $region29: #{tpu_custom_call.1} parent=11 // pred_check
          %p221 = pneg %p147
        $region30: #{tpu_custom_call.1} parent=11 // pred_check_branch
          %223 = sbr.rel (%p221) target = $region32
        $region31: #{tpu_custom_call.1} parent=11 // pred_region
          _
        $region32: #{tpu_custom_call.1} parent=11 // pred_fallthru
          _
        // Predicated region
        $region33: #{tpu_custom_call.1} parent=11 // pred_check
          %p224 = pneg %p168
        $region34: #{tpu_custom_call.1} parent=11 // pred_check_branch
          %226 = sbr.rel (%p224) target = $region36
        $region35: #{tpu_custom_call.1} parent=11 // pred_region
          _
        $region36: #{tpu_custom_call.1} parent=11 // pred_fallthru
          _
      $region12: #{tpu_custom_call.1} parent=5 // pred_fallthru
        _
      %p227 = scmp.lt.s32.totalorder %s16, 2
      // Predicated region
      $region37: #{tpu_custom_call.1} parent=5 // pred_check
        %p228 = pneg %p227
      $region38: #{tpu_custom_call.1} parent=5 // pred_check_branch
        %230 = sbr.rel (%p228) target = $region40
      $region39: #{tpu_custom_call.1} parent=5 // pred_region
        // Predicated region
        $region41: #{tpu_custom_call.1} parent=39 // pred_check
          %p231 = pneg %p36
        $region42: #{tpu_custom_call.1} parent=39 // pred_check_branch
          %233 = sbr.rel (%p231) target = $region44
        $region43: #{tpu_custom_call.1} parent=39 // pred_region
          %p234 = scmp.lt.s32.totalorder %s16, 1
          %s235 = scalar_select %p234, %s16, 1
          %s236 = smul.addr %s235, 2
          %s237 = smul.addr %s236, 8
          %s238 = scalar_lea.vmem %s0, %s237
        $region44: #{tpu_custom_call.1} parent=39 // pred_fallthru
          _
      $region40: #{tpu_custom_call.1} parent=5 // pred_fallthru
        _
      %p239 = scmp.le.s32.totalorder 1, %s16
      %p240 = scmp.lt.s32.totalorder %s16, 3
      %p241 = pnand %p239, %p240
      %p242 = pneg %p241
      // Predicated region
      $region45: #{tpu_custom_call.1} parent=5 // pred_check
        _
      $region46: #{tpu_custom_call.1} parent=5 // pred_check_branch
        %244 = sbr.rel (%p241) target = $region48
      $region47: #{tpu_custom_call.1} parent=5 // pred_region
        %s245 = ssub.s32 %s16, 1
        %p246 = scmp.lt.s32.totalorder %s21, 1
        %s247 = scalar_select %p246, %s21, 1
        %s248 = smul.addr %s247, 2
        %s249 = smul.addr %s248, 8
        %s250 = scalar_lea.vmem %s0, %s249
        %p251 = pneg %p42
        %p252 = pneg %p39
        %p253 = pneg %p63
        %p254 = pneg %p60
        %p255 = pneg %p84
        %p256 = pneg %p81
        %p257 = pneg %p105
        %p258 = pneg %p102
        %p259 = pneg %p126
        %p260 = pneg %p123
        %p261 = pneg %p147
        %p262 = pneg %p144
        %p263 = pneg %p168
        %p264 = pneg %p165
        %p265 = pneg %p194
        %p266 = pneg %p191
        %s267 = sand.u32 %s181, 1
        %s268 = scalar_lea.sflag [#allocation3], %s267
        %s269 = sand.u32 %s181, 1
        %s270 = smul.addr %s269, 16
        %s271 = scalar_lea.vmem [#allocation2], %s270
        %p272 = scmp.lt.s32.totalorder %s21, 1
        %s273 = scalar_select %p272, %s21, 1
        %s274 = smul.addr %s273, 2
        %s275 = smul.addr %s274, 8
        %s276 = scalar_lea.vmem %s0, %s275
        %v278 = vld [vmem:[%s276] sm:$0xff]
        %v279 = vld [vmem:[%s276 + $0x8] sm:$0xff]
        %v280 = vlaneseq
        %v281 = vand.u32 %v280, 127
        %v282 = vadd.s32 %v281, 128
        %vm283 = vcmp.lt.s32.totalorder %v281, 0
        %v284 = vsub.s32 0, %v281
        %v285 = vsel %vm283, %v284, %v281
        %v286 = vshrl.u32 %v285, 4
        %v287 = vand.u32 %v285, 15
        %v288 = vsub.s32 0, %v287
        %v289 = vsel %vm283, %v288, %v287
        %vm290 = vcmp.lt.s32.totalorder %v282, 0
        %v291 = vsub.s32 0, %v282
        %v292 = vsel %vm290, %v291, %v282
        %v293 = vshrl.u32 %v292, 4
        %v294 = vand.u32 %v292, 15
        %v295 = vsub.s32 0, %v294
        %v296 = vsel %vm290, %v295, %v294
        %vm297 = vcmp.ne.s32.totalorder %v289, 0
        %vm298 = vcmp.ne.s32.totalorder %v296, 0
        %vm299 = vcmp.lt.s32.totalorder %v289, 0
        %vm300 = vcmp.lt.s32.totalorder %v296, 0
        %vm301 = vmand %vm299, %vm297
        %vm302 = vmand %vm300, %vm298
        %v303 = vadd.s32 %v289, 16
        %v304 = vadd.s32 %v296, 16
        %v305 = vsel %vm301, %v303, %v289
        %v306 = vsel %vm302, %v304, %v296
        %vm307 = vcmp.ge.s32.totalorder %v305, 1
        %vm308 = vcmp.ge.s32.totalorder %v306, 1
        %vm309 = vcmp.le.s32.totalorder %v305, 14
        %vm310 = vcmp.le.s32.totalorder %v306, 14
        %v311 = vld [vmem:[%s1] sm:$0xf]
        %314 = vrot.lane.b32.xlu0 %v278, 17
        %v315 = vpop.permute.xlu0 %314
        %316 = vrot.lane.b32.xlu0 %v279, 17
        %v317 = vpop.permute.xlu0 %316
        %vm318 = vcmask 138240
        %v319 = vsel %vm318, %v315, %v317
        %v323 = vsel %vm318, 0.0, %v315
        %v324 = vsel %vm318, %v317, 0.0
        %v325 = vsel %vm307, %v323, 0.0
        %v326 = vsel %vm308, %v319, 0.0
        %329 = vrot.lane.b32.xlu0 %v323, 126
        %v330 = vpop.permute.xlu0 %329
        %331 = vrot.lane.b32.xlu0 %v319, 126
        %v332 = vpop.permute.xlu0 %331
        %333 = vrot.lane.b32.xlu0 %v324, 126
        %v334 = vpop.permute.xlu0 %333
        %vm335 = vcmask 1031168
        %v336 = vsel %vm335, %v330, %v332
        %v337 = vsel %vm335, %v332, %v334
        %v340 = vsel %vm309, %v336, 0.0
        %v341 = vsel %vm310, %v337, 0.0
        %342 = vrot.lane.b32.xlu0 %v323, 112
        %v343 = vpop.permute.xlu0 %342
        %344 = vrot.lane.b32.xlu0 %v319, 112
        %v345 = vpop.permute.xlu0 %344
        %346 = vrot.lane.b32.xlu0 %v324, 112
        %v347 = vpop.permute.xlu0 %346
        %vm348 = vcmask 916480
        %v349 = vsel %vm348, %v343, %v345
        %v350 = vsel %vm348, %v345, %v347
        %v353 = vsel %vm307, %v349, 0.0
        %v354 = vsel %vm308, %v350, 0.0
        %355 = vrot.lane.b32.xlu0 %v323, 110
        %v356 = vpop.permute.xlu0 %355
        %357 = vrot.lane.b32.xlu0 %v319, 110
        %v358 = vpop.permute.xlu0 %357
        %359 = vrot.lane.b32.xlu0 %v324, 110
        %v360 = vpop.permute.xlu0 %359
        %vm361 = vcmask 900096
        %v362 = vsel %vm361, %v356, %v358
        %v363 = vsel %vm361, %v358, %v360
        %v366 = vsel %vm309, %v362, 0.0
        %v367 = vsel %vm310, %v363, 0.0
        %368 = vrot.lane.b32.xlu0 %v323, 96
        %v369 = vpop.permute.xlu0 %368
        %370 = vrot.lane.b32.xlu0 %v319, 96
        %v371 = vpop.permute.xlu0 %370
        %372 = vrot.lane.b32.xlu0 %v324, 96
        %v373 = vpop.permute.xlu0 %372
        %vm374 = vcmask 785408
        %v375 = vsel %vm374, %v369, %v371
        %v376 = vsel %vm374, %v371, %v373
        %v379 = vsel %vm307, %v375, 0.0
        %v380 = vsel %vm308, %v376, 0.0
        %381 = vrot.lane.b32.xlu0 %v323, 94
        %v382 = vpop.permute.xlu0 %381
        %383 = vrot.lane.b32.xlu0 %v319, 94
        %v384 = vpop.permute.xlu0 %383
        %385 = vrot.lane.b32.xlu0 %v324, 94
        %v386 = vpop.permute.xlu0 %385
        %vm387 = vcmask 769024
        %v388 = vsel %vm387, %v382, %v384
        %v389 = vsel %vm387, %v384, %v386
        %v392 = vsel %vm309, %v388, 0.0
        %v393 = vsel %vm310, %v389, 0.0
        %394 = vrot.lane.b32.xlu0 %v323, 127
        %v395 = vpop.permute.xlu0 %394
        %396 = vrot.lane.b32.xlu0 %v319, 127
        %v397 = vpop.permute.xlu0 %396
        %398 = vrot.lane.b32.xlu0 %v324, 127
        %v399 = vpop.permute.xlu0 %398
        %vm400 = vcmask 1039360
        %v401 = vsel %vm400, %v395, %v397
        %v402 = vsel %vm400, %v397, %v399
        %405 = vrot.lane.b32.xlu0 %v323, 111
        %v406 = vpop.permute.xlu0 %405
        %407 = vrot.lane.b32.xlu0 %v319, 111
        %v408 = vpop.permute.xlu0 %407
        %409 = vrot.lane.b32.xlu0 %v324, 111
        %v410 = vpop.permute.xlu0 %409
        %vm411 = vcmask 908288
        %v412 = vsel %vm411, %v406, %v408
        %v413 = vsel %vm411, %v408, %v410
        %416 = vrot.lane.b32.xlu0 %v323, 95
        %v417 = vpop.permute.xlu0 %416
        %418 = vrot.lane.b32.xlu0 %v319, 95
        %v419 = vpop.permute.xlu0 %418
        %420 = vrot.lane.b32.xlu0 %v324, 95
        %v421 = vpop.permute.xlu0 %420
        %vm422 = vcmask 777216
        %v423 = vsel %vm422, %v417, %v419
        %v424 = vsel %vm422, %v419, %v421
        %v427 = vpack.c.bf16 %v401, %v325
        %v428 = vpack.c.bf16 %v402, %v326
        %v429 = vpack.c.bf16 %v353, %v340
        %v430 = vpack.c.bf16 %v354, %v341
        %v431 = vpack.c.bf16 %v366, %v412
        %v432 = vpack.c.bf16 %v367, %v413
        %v433 = vpack.c.bf16 %v423, %v379
        %v434 = vpack.c.bf16 %v424, %v380
        %v435 = vpack.c.bf16 %v392, %v392
        %v436 = vpack.c.bf16 %v393, %v393
        %vm437 = vcmask 588800
        %v439 = vsel %vm437, %v311, 0
        %vm441 = vcmask 1043456
        %v443 = vsel %vm441, %v435, 0
        %v446 = vsel %vm441, %v436, 0
        %448 = vmatprep.subr.bf16.mxu0 %v428
        %449 = vmatpush1.bf16.msra.mxu0 %v427
        %450 = vmatprep.subr.bf16.mxu0 %v430
        %451 = vmatpush1.bf16.msra.mxu0 %v429
        %452 = vmatprep.subr.bf16.mxu0 %v432
        %453 = vmatpush1.bf16.msra.mxu0 %v431
        %454 = vmatprep.subr.bf16.mxu0 %v434
        %455 = vmatpush1.bf16.msra.mxu0 %v433
        %456 = vmatprep.subr.bf16.mxu0 %v446
        %457 = vmatpush1.bf16.msra.mxu0 %v443
        %458 = vmatprep.subr.bf16.mxu0 0
        %459 = vmatpush1.bf16.msra.mxu0 0
        %460 = vmatprep.subr.bf16.mxu0 0
        %461 = vmatpush1.bf16.msra.mxu0 0
        %462 = vmatprep.subr.bf16.mxu0 0
        %463 = vmatpush1.bf16.msra.mxu0 0
        %464 = vmatprep.subr.bf16.mxu0 0
        %465 = vmatpush1.bf16.msra.mxu0 0
        %466 = vmatprep.subr.bf16.mxu0 0
        %467 = vmatpush1.bf16.msra.mxu0 0
        %468 = vmatprep.subr.bf16.mxu0 0
        %469 = vmatpush1.bf16.msra.mxu0 0
        %470 = vmatprep.subr.bf16.mxu0 0
        %471 = vmatpush1.bf16.msra.mxu0 0
        %472 = vmatprep.subr.bf16.mxu0 0
        %473 = vmatpush1.bf16.msra.mxu0 0
        %474 = vmatprep.subr.bf16.mxu0 0
        %475 = vmatpush1.bf16.msra.mxu0 0
        %476 = vmatprep.subr.bf16.mxu0 0
        %477 = vmatpush1.bf16.msra.mxu0 0
        %478 = vmatprep.subr.bf16.mxu0 0
        %479 = vmatpush1.bf16.msra.mxu0 0
        %480 = vmatprep.mubr.bf16.mxu0 0
        %481 = vmatmul.mubr.bf16.gmra.mrb[0].mxu0 %v439
        %v482 = vpop.f32.mrb[0].mxu0
        %v483 = vadd.f32 0.0, %v482
        %v484 = vpop.f32.mrb[0].mxu0
        %v485 = vadd.f32 0.0, %v484
        %v486 = vpop.f32.mrb[0].mxu0
        %v487 = vpop.f32.mrb[0].mxu0
        %488 = vdwg.mxu0
        %v489 = vld [vmem:[%s3] sm:$0xff]
        %491 = vset.pattern.permute.xlu0 0
        %492 = vperm.xlu0 %491, %v489
        %v493 = vpop.permute.xlu0 %492
        %v495 = vmul.f32 %v483, %v493
        %v496 = vmul.f32 %v485, %v493
        %v497 = vld [vmem:[%s4] sm:$0xff]
        %499 = vset.pattern.permute.xlu0 0
        %500 = vperm.xlu0 %499, %v497
        %v501 = vpop.permute.xlu0 %500
        %v503 = vadd.f32 %v495, %v501
        %v504 = vadd.f32 %v496, %v501
        %v505 = vmax.f32 %v503, 0.0
        %v506 = vmax.f32 %v504, 0.0
        %v507 = vld [vmem:[%s2] sm:$0xf]
        %510 = vrot.lane.b32.xlu0 %v505, 17
        %v511 = vpop.permute.xlu0 %510
        %512 = vrot.lane.b32.xlu0 %v506, 17
        %v513 = vpop.permute.xlu0 %512
        %v514 = vsel %vm318, %v511, %v513
        %v518 = vsel %vm318, 0.0, %v511
        %v519 = vsel %vm318, %v513, 0.0
        %v520 = vsel %vm307, %v518, 0.0
        %v521 = vsel %vm308, %v514, 0.0
        %524 = vrot.lane.b32.xlu0 %v518, 126
        %v525 = vpop.permute.xlu0 %524
        %526 = vrot.lane.b32.xlu0 %v514, 126
        %v527 = vpop.permute.xlu0 %526
        %528 = vrot.lane.b32.xlu0 %v519, 126
        %v529 = vpop.permute.xlu0 %528
        %v530 = vsel %vm335, %v525, %v527
        %v531 = vsel %vm335, %v527, %v529
        %v534 = vsel %vm309, %v530, 0.0
        %v535 = vsel %vm310, %v531, 0.0
        %536 = vrot.lane.b32.xlu0 %v518, 112
        %v537 = vpop.permute.xlu0 %536
        %538 = vrot.lane.b32.xlu0 %v514, 112
        %v539 = vpop.permute.xlu0 %538
        %540 = vrot.lane.b32.xlu0 %v519, 112
        %v541 = vpop.permute.xlu0 %540
        %v542 = vsel %vm348, %v537, %v539
        %v543 = vsel %vm348, %v539, %v541
        %v546 = vsel %vm307, %v542, 0.0
        %v547 = vsel %vm308, %v543, 0.0
        %548 = vrot.lane.b32.xlu0 %v518, 110
        %v549 = vpop.permute.xlu0 %548
        %550 = vrot.lane.b32.xlu0 %v514, 110
        %v551 = vpop.permute.xlu0 %550
        %552 = vrot.lane.b32.xlu0 %v519, 110
        %v553 = vpop.permute.xlu0 %552
        %v554 = vsel %vm361, %v549, %v551
        %v555 = vsel %vm361, %v551, %v553
        %v558 = vsel %vm309, %v554, 0.0
        %v559 = vsel %vm310, %v555, 0.0
        %560 = vrot.lane.b32.xlu0 %v518, 96
        %v561 = vpop.permute.xlu0 %560
        %562 = vrot.lane.b32.xlu0 %v514, 96
        %v563 = vpop.permute.xlu0 %562
        %564 = vrot.lane.b32.xlu0 %v519, 96
        %v565 = vpop.permute.xlu0 %564
        %v566 = vsel %vm374, %v561, %v563
        %v567 = vsel %vm374, %v563, %v565
        %v570 = vsel %vm307, %v566, 0.0
        %v571 = vsel %vm308, %v567, 0.0
        %572 = vrot.lane.b32.xlu0 %v518, 94
        %v573 = vpop.permute.xlu0 %572
        %574 = vrot.lane.b32.xlu0 %v514, 94
        %v575 = vpop.permute.xlu0 %574
        %576 = vrot.lane.b32.xlu0 %v519, 94
        %v577 = vpop.permute.xlu0 %576
        %v578 = vsel %vm387, %v573, %v575
        %v579 = vsel %vm387, %v575, %v577
        %v582 = vsel %vm309, %v578, 0.0
        %v583 = vsel %vm310, %v579, 0.0
        %584 = vrot.lane.b32.xlu0 %v518, 127
        %v585 = vpop.permute.xlu0 %584
        %586 = vrot.lane.b32.xlu0 %v514, 127
        %v587 = vpop.permute.xlu0 %586
        %588 = vrot.lane.b32.xlu0 %v519, 127
        %v589 = vpop.permute.xlu0 %588
        %v590 = vsel %vm400, %v585, %v587
        %v591 = vsel %vm400, %v587, %v589
        %594 = vrot.lane.b32.xlu0 %v518, 111
        %v595 = vpop.permute.xlu0 %594
        %596 = vrot.lane.b32.xlu0 %v514, 111
        %v597 = vpop.permute.xlu0 %596
        %598 = vrot.lane.b32.xlu0 %v519, 111
        %v599 = vpop.permute.xlu0 %598
        %v600 = vsel %vm411, %v595, %v597
        %v601 = vsel %vm411, %v597, %v599
        %604 = vrot.lane.b32.xlu0 %v518, 95
        %v605 = vpop.permute.xlu0 %604
        %606 = vrot.lane.b32.xlu0 %v514, 95
        %v607 = vpop.permute.xlu0 %606
        %608 = vrot.lane.b32.xlu0 %v519, 95
        %v609 = vpop.permute.xlu0 %608
        %v610 = vsel %vm422, %v605, %v607
        %v611 = vsel %vm422, %v607, %v609
        %v614 = vpack.c.bf16 %v590, %v520
        %v615 = vpack.c.bf16 %v591, %v521
        %v616 = vpack.c.bf16 %v546, %v534
        %v617 = vpack.c.bf16 %v547, %v535
        %v618 = vpack.c.bf16 %v558, %v600
        %v619 = vpack.c.bf16 %v559, %v601
        %v620 = vpack.c.bf16 %v610, %v570
        %v621 = vpack.c.bf16 %v611, %v571
        %v622 = vpack.c.bf16 %v582, %v582
        %v623 = vpack.c.bf16 %v583, %v583
        %v625 = vsel %vm437, %v507, 0
        %v628 = vsel %vm441, %v622, 0
        %v631 = vsel %vm441, %v623, 0
        %633 = vmatprep.subr.bf16.mxu0 %v615
        %634 = vmatpush1.bf16.msra.mxu0 %v614
        %635 = vmatprep.subr.bf16.mxu0 %v617
        %636 = vmatpush1.bf16.msra.mxu0 %v616
        %637 = vmatprep.subr.bf16.mxu0 %v619
        %638 = vmatpush1.bf16.msra.mxu0 %v618
        %639 = vmatprep.subr.bf16.mxu0 %v621
        %640 = vmatpush1.bf16.msra.mxu0 %v620
        %641 = vmatprep.subr.bf16.mxu0 %v631
        %642 = vmatpush1.bf16.msra.mxu0 %v628
        %643 = vmatprep.subr.bf16.mxu0 0
        %644 = vmatpush1.bf16.msra.mxu0 0
        %645 = vmatprep.subr.bf16.mxu0 0
        %646 = vmatpush1.bf16.msra.mxu0 0
        %647 = vmatprep.subr.bf16.mxu0 0
        %648 = vmatpush1.bf16.msra.mxu0 0
        %649 = vmatprep.subr.bf16.mxu0 0
        %650 = vmatpush1.bf16.msra.mxu0 0
        %651 = vmatprep.subr.bf16.mxu0 0
        %652 = vmatpush1.bf16.msra.mxu0 0
        %653 = vmatprep.subr.bf16.mxu0 0
        %654 = vmatpush1.bf16.msra.mxu0 0
        %655 = vmatprep.subr.bf16.mxu0 0
        %656 = vmatpush1.bf16.msra.mxu0 0
        %657 = vmatprep.subr.bf16.mxu0 0
        %658 = vmatpush1.bf16.msra.mxu0 0
        %659 = vmatprep.subr.bf16.mxu0 0
        %660 = vmatpush1.bf16.msra.mxu0 0
        %661 = vmatprep.subr.bf16.mxu0 0
        %662 = vmatpush1.bf16.msra.mxu0 0
        %663 = vmatprep.subr.bf16.mxu0 0
        %664 = vmatpush1.bf16.msra.mxu0 0
        %665 = vmatprep.mubr.bf16.mxu0 0
        %666 = vmatmul.mubr.bf16.gmra.mrb[0].mxu0 %v625
        %v667 = vpop.f32.mrb[0].mxu0
        %v668 = vadd.f32 0.0, %v667
        %v669 = vpop.f32.mrb[0].mxu0
        %v670 = vadd.f32 0.0, %v669
        %v671 = vpop.f32.mrb[0].mxu0
        %v672 = vpop.f32.mrb[0].mxu0
        %673 = vdwg.mxu0
        %v674 = vld [vmem:[%s5] sm:$0xff]
        %676 = vset.pattern.permute.xlu0 0
        %677 = vperm.xlu0 %676, %v674
        %v678 = vpop.permute.xlu0 %677
        %v680 = vmul.f32 %v668, %v678
        %v681 = vmul.f32 %v670, %v678
        %v682 = vld [vmem:[%s6] sm:$0xff]
        %684 = vset.pattern.permute.xlu0 0
        %685 = vperm.xlu0 %684, %v682
        %v686 = vpop.permute.xlu0 %685
        %v688 = vadd.f32 %v680, %v686
        %v689 = vadd.f32 %v681, %v686
        %v690 = vadd.f32 %v688, %v278
        %v691 = vadd.f32 %v689, %v279
        %v692 = vmax.f32 %v690, 0.0
        %v693 = vmax.f32 %v691, 0.0
        %694 = vst [vmem:[%s271] sm:$0xff] %v692
        %695 = vst [vmem:[%s271 + $0x8] sm:$0xff] %v693
        %s696 = sand.u32 %s181, 1
        %s697 = scalar_lea.sflag [#allocation3], %s696
        %s698 = sand.u32 %s181, 1
        %s699 = smul.addr %s698, 16
        %s700 = scalar_lea.vmem [#allocation2], %s699
        // Predicated region
        $region49: #{tpu_custom_call.1} parent=47 // pred_check
          %p701 = pneg %p191
        $region50: #{tpu_custom_call.1} parent=47 // pred_check_branch
          %703 = sbr.rel (%p701) target = $region52
        $region51: #{tpu_custom_call.1} parent=47 // pred_region
          %s705 = ssub.s32 256, 256
          %706 = vsyncadd %s697, %s705
          %s707 = smul.addr %s21, 2
          %s708 = smul.addr %s707, 128
          %s709 = scalar_lea.hbm %s7, %s708
          %s711 = sshll.u32 %s700, 4
          %s712 = int_to_ptr.vmem [resolvable:$true] %s711
          %714 = dma.vmem_to_hbm [thread:$0]  %s712, 256, %s709, %s697
        $region52: #{tpu_custom_call.1} parent=47 // pred_fallthru
          _
      $region48: #{tpu_custom_call.1} parent=5 // pred_fallthru
        _
      %p715 = scmp.le.s32.totalorder 2, %s16
      // Predicated region
      $region53: #{tpu_custom_call.1} parent=5 // pred_check
        %p716 = pneg %p715
      $region54: #{tpu_custom_call.1} parent=5 // pred_check_branch
        %718 = sbr.rel (%p716) target = $region56
      $region55: #{tpu_custom_call.1} parent=5 // pred_region
        %s719 = ssub.s32 %s16, 2
        // Predicated region
        $region57: #{tpu_custom_call.1} parent=55 // pred_check
          %p720 = pneg %p197
        $region58: #{tpu_custom_call.1} parent=55 // pred_check_branch
          %722 = sbr.rel (%p720) target = $region60
        $region59: #{tpu_custom_call.1} parent=55 // pred_region
          %s723 = sand.u32 %s182, 1
          %s724 = scalar_lea.sflag [#allocation3], %s723
          %s725 = sand.u32 %s182, 1
          %s726 = smul.addr %s725, 16
          %s727 = scalar_lea.vmem [#allocation2], %s726
          %728 = dma.done %s724, 256
        $region60: #{tpu_custom_call.1} parent=55 // pred_fallthru
          _
      $region56: #{tpu_custom_call.1} parent=5 // pred_fallthru
        _
    $region6: #{tpu_custom_call.1} parent=1 // loop_footer
      %s20 = sadd.s32 1, %s16
    $region7: #{tpu_custom_call.1} parent=1 // loop_footer_branch
      %15 = sbr.rel target = $region3
    $region8: #{tpu_custom_call.1} parent=1 // loop_exit
      _
    %729 = vsyncpa [#allocation3], 1
    %s730 = scalar_lea.sflag [#allocation3], 1
    %731 = vsyncpa %s730, 1

</llo_original>
